<compile_context>
chip_gen: v6e
topology: v6e:2x2x1
jax: 0.10.0
libtpu: 0.0.40
codegen_flags: <defaults>
</compile_context>

<pallas_src>
import functools

import jax
import jax.numpy as jnp
from jax import lax
from jax.experimental import pallas as pl
from jax.experimental.pallas import tpu as pltpu


# ----------------------------------------------------------------------------
# small helpers
# ----------------------------------------------------------------------------
def _round_up(n, m):
    return (n + m - 1) // m * m


def _vmem_limit_bytes():
    """Per-generation scoped-VMEM limit (physical minus margin, capped)."""
    try:
        cap = int(pltpu.get_tpu_info().vmem_capacity_bytes)
    except Exception:
        cap = 64 << 20                      # conservative: v7x physical VMEM
    cap = max(cap, 32 << 20)
    return int(min(cap - (4 << 20), 100 << 20))


def _pick_col_tile(G):
    """Lane-dense output column tile for the input projection."""
    if G <= 1024:
        return G
    for tn in (1024, 512, 256, 128):
        if G % tn == 0:
            return tn
    return G


def _pick_row_tile(M, row_block):
    tm = min(row_block, _round_up(M, 8))
    # Shrink the row tile while padding waste would exceed ~12.5%.
    while tm > 8 and (_round_up(M, tm) - M) * 8 > _round_up(M, tm):
        tm = max(8, tm // 2)
    return tm


def _choose_time_chunk(T, cap):
    """(chunk, padded_T): prefer an exact divisor of T, else pad T up."""
    cap = max(1, min(T, cap))
    best = 1
    for c in range(cap, 0, -1):
        if T % c == 0:
            best = c
            break
    if best * 2 >= cap:
        return best, T
    return cap, _round_up(T, cap)


def revert_varlen(x, lengths):
    """Reverse the valid prefix of each sequence (emulates C.revert_varlen_tensor).

    x: (T, B, D); positions t >= lengths[b] are left in place."""
    T = x.shape[0]
    t = jnp.arange(T, dtype=lengths.dtype)[:, None]            # (T, 1)
    L = lengths[None, :]                                       # (1, B)
    idx = jnp.where(t < L, L - 1 - t, t)                       # (T, B)
    idx3 = jnp.broadcast_to(idx[:, :, None], x.shape)
    return jnp.take_along_axis(x, idx3, axis=0)


def length_mask(lengths, T, dtype):
    """(T, B, 1) mask, 1.0 where t < lengths[b] (emulates C.set_mask_cpp)."""
    t = jnp.arange(T, dtype=lengths.dtype)[:, None]
    return (t < lengths[None, :]).astype(dtype)[:, :, None]


# ----------------------------------------------------------------------------
# Pallas kernel 1: fused hoisted input projection for BOTH directions
#   pre[d] = x_d @ W_ih[d]^T + (b_ih[d] + b_hh[d]),  bf16 output.
# grid = (direction, row tiles, col tiles), all parallel.
# ----------------------------------------------------------------------------
def _input_proj_kernel(x_ref, w_ref, b_ref, out_ref):
    out_ref[...] = (
        jnp.dot(x_ref[...], w_ref[...], preferred_element_type=jnp.float32)
        + b_ref[...]
    ).astype(out_ref.dtype)


def input_projection_fused(x_both, w_both_t, b_both, *, row_block=512):
    """x_both: (2, M, D); w_both_t: (2, D, G); b_both: (2, 1, G) -> (2, M, G) bf16."""
    nd, M, D = x_both.shape
    G = w_both_t.shape[-1]
    tm = _pick_row_tile(M, row_block)
    Mp = _round_up(M, tm)
    if Mp != M:
        x_both = jnp.pad(x_both, ((0, 0), (0, Mp - M), (0, 0)))
    tn = _pick_col_tile(G)

    cost = pl.CostEstimate(
        flops=2 * nd * Mp * D * G,
        transcendentals=0,
        bytes_accessed=nd * (Mp * D * 2 + D * G * 2 + Mp * G * 2 + G * 4))

    out = pl.pallas_call(
        _input_proj_kernel,
        out_shape=jax.ShapeDtypeStruct((nd, Mp, G), jnp.bfloat16),
        grid_spec=pltpu.PrefetchScalarGridSpec(
            num_scalar_prefetch=0,
            grid=(nd, Mp // tm, G // tn),
            in_specs=[
                pl.BlockSpec((None, tm, D), lambda d, m, n: (d, m, 0)),   # x rows
                pl.BlockSpec((None, D, tn), lambda d, m, n: (d, 0, n)),   # W_ih^T
                pl.BlockSpec((None, 1, tn), lambda d, m, n: (d, 0, n)),   # bias
            ],
            out_specs=pl.BlockSpec((None, tm, tn), lambda d, m, n: (d, m, n)),
        ),
        compiler_params=pltpu.CompilerParams(
            dimension_semantics=("parallel", "parallel", "parallel"),
            vmem_limit_bytes=min(_vmem_limit_bytes(), 64 << 20)),
        cost_estimate=cost,
    )(x_both.astype(jnp.bfloat16), w_both_t.astype(jnp.bfloat16),
      b_both.astype(jnp.float32))
    return out[:, :M, :] if Mp != M else out


# ----------------------------------------------------------------------------
# Pallas kernel 2: bidirectional LSTM recurrence.
# grid = (direction [parallel], time-chunks [arbitrary]).
# dir 0 = reverse weights on original input (output length-masked in-kernel)
# dir 1 = forward weights on pre-reversed input (reverted back outside).
# ----------------------------------------------------------------------------
def _bidir_lstm_kernel(len_ref, pre_ref, whh_hbm, out_ref,
                       whh_vmem, dma_sem, h_scr, c_scr, *,
                       time_chunk, unroll):
    d = pl.program_id(0)
    H = h_scr.shape[-1]

    @pl.when(pl.program_id(1) == 0)
    def _init():
        # One-time (per direction / per core) recurrent-weight DMA; overlap
        # the copy with the zero-init of the h/c state.
        cp = pltpu.make_async_copy(whh_hbm.at[d], whh_vmem, dma_sem)
        cp.start()
        h_scr[...] = jnp.zeros_like(h_scr)       # torch.nn.LSTM zero init state
        c_scr[...] = jnp.zeros_like(c_scr)
        cp.wait()

    w = whh_vmem[...]                            # (H, 4H) bf16, this direction
    lengths = len_ref[...]                       # (B, 1) int32
    t0 = pl.program_id(1) * time_chunk
    unmasked_dir = d != 0                        # mask only applies to dir 0

    def cell(gates, c_prev):                     # gates: (B, 4H) f32
        i = jax.nn.sigmoid(gates[:, 0 * H:1 * H])
        f = jax.nn.sigmoid(gates[:, 1 * H:2 * H])
        g = jnp.tanh(gates[:, 2 * H:3 * H])
        o = jax.nn.sigmoid(gates[:, 3 * H:4 * H])
        c_new = f * c_prev + i * g
        h_new = o * jnp.tanh(c_new)
        return h_new, c_new

    def step(s, carry):
        h, c = carry                             # (B, H) f32
        # TODO(synk): for tiny batches (B<=32) the MXU re-loads W_hh every step;
        # a weight-resident matmul_push_rhs/matmul_acc_lhs path would help there.
        gates = (jnp.dot(h.astype(jnp.bfloat16), w,
                         preferred_element_type=jnp.float32)
                 + pre_ref[s].astype(jnp.float32))
        h, c = cell(gates, c)
        # fused length mask on the dir-0 output (state stays unmasked, as in ref)
        keep = jnp.logical_or(unmasked_dir, (t0 + s) < lengths)   # (B, 1)
        out_ref[s] = jnp.where(keep, h, 0.0).astype(out_ref.dtype)
        return h, c

    h, c = lax.fori_loop(0, time_chunk, step, (h_scr[...], c_scr[...]),
                         unroll=unroll)
    h_scr[...] = h
    c_scr[...] = c


def bidir_lstm_recurrence(pre_both, lengths, whh_both):
    """pre_both: (2, T, B, 4H) bf16; lengths: (B,) int; whh_both: (2, H, 4H) bf16.

    Returns (2, T, B, H) f32; direction 0 is length-masked in-kernel."""
    nd, T, B, G = pre_both.shape
    H = G // 4

    vmem_limit = _vmem_limit_bytes()
    budget = (vmem_limit * 3) // 4
    fixed = H * G * 2 + 2 * B * H * 4 + 2 * B * 4 + (2 << 20)
    per_step = 2 * (B * G * 2) + 2 * (B * H * 4)   # dbl-buffered pre + out
    tc_cap = int(max(1, min(128, (budget - fixed) // per_step)))
    tc, T_pad = _choose_time_chunk(T, tc_cap)
    if T_pad != T:
        pre_both = jnp.pad(pre_both, ((0, 0), (0, T_pad - T), (0, 0), (0, 0)))
    unroll = 4 if B * G <= 32768 else 2            # cap unroll -> avoid spills
    unroll = max(1, min(unroll, tc))

    len2d = lengths.astype(jnp.int32).reshape(B, 1)

    cost = pl.CostEstimate(
        flops=2 * nd * T_pad * B * H * G + 10 * nd * T_pad * B * G,
        transcendentals=nd * T_pad * B * 5 * H,
        bytes_accessed=(nd * T_pad * B * G * 2 + nd * T_pad * B * H * 4
                        + nd * H * G * 2 + B * 4))

    out = pl.pallas_call(
        functools.partial(_bidir_lstm_kernel, time_chunk=tc, unroll=unroll),
        out_shape=jax.ShapeDtypeStruct((nd, T_pad, B, H), jnp.float32),
        grid_spec=pltpu.PrefetchScalarGridSpec(
            num_scalar_prefetch=0,
            grid=(nd, T_pad // tc),
            in_specs=[
                pl.BlockSpec((B, 1), lambda d, t: (0, 0)),                 # lengths
                pl.BlockSpec((None, tc, B, G), lambda d, t: (d, t, 0, 0)),  # pre
                pl.BlockSpec(memory_space=pl.ANY),                         # W_hh^T
            ],
            out_specs=pl.BlockSpec((None, tc, B, H), lambda d, t: (d, t, 0, 0)),
            scratch_shapes=[
                pltpu.VMEM((H, G), jnp.bfloat16),   # single-buffered W_hh^T
                pltpu.SemaphoreType.DMA(()),        # weight DMA semaphore
                pltpu.VMEM((B, H), jnp.float32),    # h state
                pltpu.VMEM((B, H), jnp.float32),    # c state
            ],
        ),
        compiler_params=pltpu.CompilerParams(
            dimension_semantics=("parallel", "arbitrary"),
            vmem_limit_bytes=vmem_limit),
        cost_estimate=cost,
    )(len2d, pre_both, whh_both)
    return out[:, :T] if T_pad != T else out


# ----------------------------------------------------------------------------
# EmuBidirLSTM forward (the emulated batch <= 512 branch).
# ----------------------------------------------------------------------------
def emu_bidir_lstm(x, lengths, p):
    """x: (T, B, input_size) f32, lengths: (B,) i32 -> (T, B, 2*hidden) f32.

    out = cat([ LSTM(reverse weights)(x) * mask,
                revert(LSTM(forward weights)(revert(x))) ], dim=2)
    exactly matching EmuBidirLSTM.emu_bidir_lstm."""
    # TODO(synk): the reference dispatches to a packed cuDNN bidirectional LSTM
    # when batch > 512; only the emulated (batch <= 512) path is implemented.
    T, B, D = x.shape
    H = p["w_hh"].shape[1]
    G = 4 * H

    # TODO(synk): kept as a plain-JAX gather for exact parity with
    # C.revert_varlen_tensor (padded positions keep evolving state, as in ref).
    x_rev = revert_varlen(x, lengths)

    # Fused hoisted input projections for both directions (single kernel).
    x_both = jnp.stack([x.reshape(T * B, D).astype(jnp.bfloat16),
                        x_rev.reshape(T * B, D).astype(jnp.bfloat16)], axis=0)
    w_both = jnp.stack([p["w_ih_rev"].T, p["w_ih"].T], axis=0)
    b_both = jnp.stack([p["b_ih_rev"] + p["b_hh_rev"],
                        p["b_ih"] + p["b_hh"]], axis=0).reshape(2, 1, G)
    pre_both = input_projection_fused(x_both, w_both, b_both).reshape(2, T, B, G)

    whh_both = jnp.stack([p["w_hh_rev"].T, p["w_hh"].T],
                         axis=0).astype(jnp.bfloat16)

    out = bidir_lstm_recurrence(pre_both, lengths, whh_both)
    out0m = out[0]                                # reverse weights, masked
    outputs = revert_varlen(out[1], lengths)      # forward weights, re-reverted
    return jnp.concatenate([out0m, outputs], axis=2)   # (T, B, 2H)


# ----------------------------------------------------------------------------
# Pure-JAX reference (f32 lax.scan) for a sanity check.
# ----------------------------------------------------------------------------
def _lstm_ref(x, w_ih, w_hh, b_ih, b_hh):
    B = x.shape[1]
    H = w_hh.shape[1]
    wih_t, whh_t, b = w_ih.T, w_hh.T, b_ih + b_hh

    def step(carry, xt):
        h, c = carry
        gates = xt @ wih_t + h @ whh_t + b
        i, f, g, o = jnp.split(gates, 4, axis=-1)
        c = jax.nn.sigmoid(f) * c + jax.nn.sigmoid(i) * jnp.tanh(g)
        h = jax.nn.sigmoid(o) * jnp.tanh(c)
        return (h, c), h

    init = (jnp.zeros((B, H), jnp.float32), jnp.zeros((B, H), jnp.float32))
    _, hs = lax.scan(step, init, x)
    return hs


def emu_bidir_lstm_ref(x, lengths, p):
    T = x.shape[0]
    mask = length_mask(lengths, T, x.dtype)
    x_rev = revert_varlen(x, lengths)
    out1 = _lstm_ref(x_rev, p["w_ih"], p["w_hh"], p["b_ih"], p["b_hh"])
    outputs = revert_varlen(out1, lengths)
    out0 = _lstm_ref(x, p["w_ih_rev"], p["w_hh_rev"],
                     p["b_ih_rev"], p["b_hh_rev"]) * mask
    return jnp.concatenate([out0, outputs], axis=2)


# ----------------------------------------------------------------------------
# Deterministic parameter construction (torch.nn.LSTM-style uniform init).
# ----------------------------------------------------------------------------
def make_params(key, input_size, hidden_size):
    H = hidden_size
    bound = 1.0 / (H ** 0.5)
    names = ["w_ih", "w_hh", "b_ih", "b_hh",
             "w_ih_rev", "w_hh_rev", "b_ih_rev", "b_hh_rev"]
    shapes = [(4 * H, input_size), (4 * H, H), (4 * H,), (4 * H,)] * 2
    keys = jax.random.split(key, len(names))
    return {n: jax.random.uniform(k, s, jnp.float32, -bound, bound)
            for n, k, s in zip(names, keys, shapes)}


if __name__ == "__main__":
    T, B, D, H = 8, 8, 128, 128          # seq, batch, input_size, hidden_size
    root = jax.random.PRNGKey(0)
    k_par, k_x = jax.random.split(root)

    params = make_params(k_par, D, H)
    x = jax.random.normal(k_x, (T, B, D), jnp.float32)
    lengths = jnp.array([8, 7, 6, 5, 4, 3, 2, 2], dtype=jnp.int32)

    out = jax.block_until_ready(emu_bidir_lstm(x, lengths, params))
    assert out.shape == (T, B, 2 * H) and out.dtype == jnp.float32

    ref = jax.block_until_ready(emu_bidir_lstm_ref(x, lengths, params))
    max_err = float(jnp.max(jnp.abs(out - ref)))
    assert max_err < 5e-2, f"mismatch vs reference: max_err={max_err}"

    print("KERNEL_OK")
</pallas_src>

<mosaic_0001>
module attributes {stable_mosaic.version = 11 : i64} {
  func.func @_input_proj_kernel(%arg0: i32, %arg1: i32, %arg2: i32, %arg3: memref<1x64x128xbf16, #tpu.memory_space<vmem>>, %arg4: memref<1x128x512xbf16, #tpu.memory_space<vmem>>, %arg5: memref<1x1x512xf32, #tpu.memory_space<vmem>>, %arg6: memref<1x64x512xbf16, #tpu.memory_space<vmem>>) attributes {dimension_semantics = [#tpu.dimension_semantics<parallel>, #tpu.dimension_semantics<parallel>, #tpu.dimension_semantics<parallel>], iteration_bounds = array<i64: 2, 1, 1>, scalar_prefetch = 0 : i64, scratch_operands = 0 : i64, tpu.core_type = #tpu.core_type<tc>, window_params = [{transform_indices = @transform_0, window_bounds = array<i64: 1, 64, 128>}, {transform_indices = @transform_1, window_bounds = array<i64: 1, 128, 512>}, {transform_indices = @transform_2, window_bounds = array<i64: 1, 1, 512>}, {transform_indices = @transform_3, window_bounds = array<i64: 1, 64, 512>}]} {
    %c0 = arith.constant 0 : index
    %c0_0 = arith.constant 0 : index
    %c0_1 = arith.constant 0 : index
    %0 = vector.load %arg3[%c0, %c0_0, %c0_1] : memref<1x64x128xbf16, #tpu.memory_space<vmem>>, vector<1x64x128xbf16>
    %1 = vector.shape_cast %0 : vector<1x64x128xbf16> to vector<64x128xbf16>
    %c0_2 = arith.constant 0 : index
    %c0_3 = arith.constant 0 : index
    %c0_4 = arith.constant 0 : index
    %2 = vector.load %arg4[%c0_2, %c0_3, %c0_4] : memref<1x128x512xbf16, #tpu.memory_space<vmem>>, vector<1x128x512xbf16>
    %3 = vector.shape_cast %2 : vector<1x128x512xbf16> to vector<128x512xbf16>
    %cst = arith.constant dense<0.000000e+00> : vector<64x512xf32>
    %4 = tpu.matmul %1, %3, %cst {dimension_numbers = #tpu.dot_dimension_numbers<[1], [0], [0], [1], [0, 0, 1, 1], [], []>} : vector<64x128xbf16>, vector<128x512xbf16>, vector<64x512xf32> -> vector<64x512xf32>
    %c0_5 = arith.constant 0 : index
    %c0_6 = arith.constant 0 : index
    %c0_7 = arith.constant 0 : index
    %5 = vector.load %arg5[%c0_5, %c0_6, %c0_7] : memref<1x1x512xf32, #tpu.memory_space<vmem>>, vector<1x1x512xf32>
    %6 = vector.shape_cast %5 : vector<1x1x512xf32> to vector<1x512xf32>
    %7 = vector.broadcast %6 : vector<1x512xf32> to vector<64x512xf32>
    %8 = arith.addf %4, %7 : vector<64x512xf32>
    %9 = arith.truncf %8 : vector<64x512xf32> to vector<64x512xbf16>
    %c0_8 = arith.constant 0 : index
    %c0_9 = arith.constant 0 : index
    %c0_10 = arith.constant 0 : index
    %10 = vector.load %arg6[%c0_8, %c0_9, %c0_10] : memref<1x64x512xbf16, #tpu.memory_space<vmem>>, vector<1x64x512xbf16>
    %11 = vector.shape_cast %10 : vector<1x64x512xbf16> to vector<64x512xbf16>
    %12 = vector.shape_cast %9 : vector<64x512xbf16> to vector<1x64x512xbf16>
    tpu.vector_store %arg6[%c0_8, %c0_9, %c0_10], %12 {strides = array<i32>} : memref<1x64x512xbf16, #tpu.memory_space<vmem>>, vector<1x64x512xbf16>,
    return
  }
  func.func @transform_0(%arg0: i32, %arg1: i32, %arg2: i32) -> (i32, i32, i32) {
    %c0_i32 = arith.constant 0 : i32
    %c0_i32_0 = arith.constant 0 : i32
    return %arg0, %arg1, %c0_i32 : i32, i32, i32
  }
  func.func @transform_1(%arg0: i32, %arg1: i32, %arg2: i32) -> (i32, i32, i32) {
    %c0_i32 = arith.constant 0 : i32
    %c0_i32_0 = arith.constant 0 : i32
    return %arg0, %c0_i32, %arg2 : i32, i32, i32
  }
  func.func @transform_2(%arg0: i32, %arg1: i32, %arg2: i32) -> (i32, i32, i32) {
    %c0_i32 = arith.constant 0 : i32
    %c0_i32_0 = arith.constant 0 : i32
    return %arg0, %c0_i32, %arg2 : i32, i32, i32
  }
  func.func @transform_3(%arg0: i32, %arg1: i32, %arg2: i32) -> (i32, i32, i32) {
    %c0_i32 = arith.constant 0 : i32
    return %arg0, %arg1, %arg2 : i32, i32, i32
  }
}

</mosaic_0001>

<llo_original>
// kernel: tpu_custom_call.1
$region0: #{tpu_custom_call.1}
  #allocation0 [shape = 'u32[]', space=smem, size = 0x4, offset = 0x4, fixed_abs, tag = 'smem constant byte address 0x4 - core index']
  #allocation1 [shape = 'u32[144,128]{1,0:T(1,128)}', space=vmem, size = 0x12000, scoped, tag = 'internal scratch']
  %s0 = inlined_call_operand.hbm [shape: bf16[2,64,128], index: 0, kind: input, shape index: {}]
  %s1 = inlined_call_operand.hbm [shape: bf16[2,128,512], index: 1, kind: input, shape index: {}]
  %s2 = inlined_call_operand.hbm [shape: f32[2,1,512], index: 2, kind: input, shape index: {}]
  %s3 = inlined_call_operand.hbm [shape: bf16[2,64,512], index: 3, kind: output, shape index: {}]
  %s4 = sld [smem:[#allocation0]]
  $region57: #{tpu_custom_call.1} parent=0
    _
  %s6 = ssub.s32 1, %s4
  %s7 = scalar_select 0, %s6, %s4
  $region1: #{tpu_custom_call.1} parent=0
    #allocation2 [shape = 'u8[32768]{0}', space=vmem, size = 0x8000, scoped, tag = 'input window, operand 0']
    #allocation3 [shape = 's32[2]{0}', space=sflag, size = 0x8, scoped, tag = 'scoped memory for tpu_custom_call.1']
    #allocation4 [shape = 's32[2]{0}', space=sflag, size = 0x8, scoped, tag = 'scoped memory for tpu_custom_call.1']
    #allocation5 [shape = 'u8[262144]{0}', space=vmem, size = 0x40000, scoped, tag = 'input window, operand 1']
    #allocation6 [shape = 's32[2]{0}', space=sflag, size = 0x8, scoped, tag = 'scoped memory for tpu_custom_call.1']
    #allocation7 [shape = 'u8[4096]{0}', space=vmem, size = 0x1000, scoped, tag = 'input window, operand 2']
    #allocation8 [shape = 'u8[131072]{0}', space=vmem, size = 0x20000, scoped, tag = 'output window, operand 0']
    %8 = vsyncpa [#allocation3], 0
    %s9 = scalar_lea.sflag [#allocation3], 1
    %10 = vsyncpa %s9, 0
    %11 = vsyncpa [#allocation6], 0
    %s12 = scalar_lea.sflag [#allocation6], 1
    %13 = vsyncpa %s12, 0
    %14 = vsyncpa [#allocation4], 0
    %s15 = scalar_lea.sflag [#allocation4], 1
    %16 = vsyncpa %s15, 0
    loop: start=0, step=1, limit=4
    $region2: #{tpu_custom_call.1} parent=1 // loop_pre_header
      _
    $region3: #{tpu_custom_call.1} parent=1 // loop_header
      %s18 = sphi 0, %s22
      %p19 = scmp.ge.s32.totalorder %s18, 4
      %s25 = sphi 0, %s44
      %s26 = sphi 0, %s40
      %s27 = sphi 0, %s36
      %s28 = sphi 0, %s25
      %s29 = sphi 0, %s26
      %s30 = sphi 0, %s27
      %s31 = sphi 0, %s28
      %s32 = sphi 0, %s29
      %s33 = sphi 0, %s30
      %s49 = sphi 0, %s51
      %s52 = sphi 0, %s49
      %s53 = sphi 0, %s52
      %s69 = sphi 0, %s53
      %s77 = sphi 0, %s79
      %s80 = sphi 0, %s77
      %s81 = sphi 0, %s80
      %s97 = sphi 0, %s81
      %s105 = sphi 0, %s107
      %s108 = sphi 0, %s105
      %s109 = sphi 0, %s108
      %s125 = sphi 0, %s109
      %s135 = sphi 0, %s137
      %s138 = sphi 0, %s135
      %s139 = sphi 0, %s138
      %s155 = sphi 0, %s139
    $region4: #{tpu_custom_call.1} parent=1 // loop_header_branch
      %21 = sbr.rel (%p19) target = $region8
    $region5: #{tpu_custom_call.1} parent=1 // loop_body
      %s23 = ssub.s32 %s18, 1
      %s24 = ssub.s32 %s18, 2
      %s34 = sadd.s32 1, %s27
      %p35 = scmp.ge.s32.totalorder %s34, 1
      %s36 = scalar_select %p35, 0, %s34
      %s37 = sadd.s32 1, %s26
      %s38 = scalar_select %p35, %s37, %s26
      %p39 = scmp.ge.s32.totalorder %s38, 1
      %s40 = scalar_select %p39, 0, %s38
      %s41 = sadd.s32 1, %s25
      %s42 = scalar_select %p39, %s41, %s25
      %p43 = scmp.ge.s32.totalorder %s42, 2
      %s44 = scalar_select %p43, 0, %s42
      %s45 = ssub.s32 %s25, %s44
      %s46 = ssub.s32 %s26, %s40
      %s47 = sor.u32 %s45, %s46
      %p48 = scmp.eq.s32.totalorder %s47, 0
      %s50 = sadd.s32 %s49, 1
      %s51 = scalar_select %p48, %s49, %s50
      %p54 = pneg %p48
      %p55 = scmp.eq.s32.totalorder %s18, 1
      %p56 = por %p54, %p55
      %p57 = scmp.ne.s32.totalorder %s49, %s52
      %p58 = scmp.eq.s32.totalorder %s18, 0
      %p59 = por %p57, %p58
      %p60 = scmp.ne.s32.totalorder %s49, %s52
      %p61 = scmp.eq.s32.totalorder %s23, 1
      %p62 = por %p60, %p61
      %p63 = scmp.ne.s32.totalorder %s52, %s53
      %p64 = scmp.eq.s32.totalorder %s23, 0
      %p65 = por %p63, %p64
      %p66 = scmp.ne.s32.totalorder %s52, %s53
      %p67 = scmp.eq.s32.totalorder %s24, 1
      %p68 = por %p66, %p67
      %p70 = scmp.ne.s32.totalorder %s53, %s69
      %p71 = scmp.eq.s32.totalorder %s24, 0
      %p72 = por %p70, %p71
      %s73 = ssub.s32 %s25, %s44
      %s74 = ssub.s32 %s27, %s36
      %s75 = sor.u32 %s73, %s74
      %p76 = scmp.eq.s32.totalorder %s75, 0
      %s78 = sadd.s32 %s77, 1
      %s79 = scalar_select %p76, %s77, %s78
      %p82 = pneg %p76
      %p83 = scmp.eq.s32.totalorder %s18, 1
      %p84 = por %p82, %p83
      %p85 = scmp.ne.s32.totalorder %s77, %s80
      %p86 = scmp.eq.s32.totalorder %s18, 0
      %p87 = por %p85, %p86
      %p88 = scmp.ne.s32.totalorder %s77, %s80
      %p89 = scmp.eq.s32.totalorder %s23, 1
      %p90 = por %p88, %p89
      %p91 = scmp.ne.s32.totalorder %s80, %s81
      %p92 = scmp.eq.s32.totalorder %s23, 0
      %p93 = por %p91, %p92
      %p94 = scmp.ne.s32.totalorder %s80, %s81
      %p95 = scmp.eq.s32.totalorder %s24, 1
      %p96 = por %p94, %p95
      %p98 = scmp.ne.s32.totalorder %s81, %s97
      %p99 = scmp.eq.s32.totalorder %s24, 0
      %p100 = por %p98, %p99
      %s101 = ssub.s32 %s25, %s44
      %s102 = ssub.s32 %s27, %s36
      %s103 = sor.u32 %s101, %s102
      %p104 = scmp.eq.s32.totalorder %s103, 0
      %s106 = sadd.s32 %s105, 1
      %s107 = scalar_select %p104, %s105, %s106
      %p110 = pneg %p104
      %p111 = scmp.eq.s32.totalorder %s18, 1
      %p112 = por %p110, %p111
      %p113 = scmp.ne.s32.totalorder %s105, %s108
      %p114 = scmp.eq.s32.totalorder %s18, 0
      %p115 = por %p113, %p114
      %p116 = scmp.ne.s32.totalorder %s105, %s108
      %p117 = scmp.eq.s32.totalorder %s23, 1
      %p118 = por %p116, %p117
      %p119 = scmp.ne.s32.totalorder %s108, %s109
      %p120 = scmp.eq.s32.totalorder %s23, 0
      %p121 = por %p119, %p120
      %p122 = scmp.ne.s32.totalorder %s108, %s109
      %p123 = scmp.eq.s32.totalorder %s24, 1
      %p124 = por %p122, %p123
      %p126 = scmp.ne.s32.totalorder %s109, %s125
      %p127 = scmp.eq.s32.totalorder %s24, 0
      %p128 = por %p126, %p127
      %s129 = ssub.s32 %s25, %s44
      %s130 = ssub.s32 %s26, %s40
      %s131 = sor.u32 %s129, %s130
      %s132 = ssub.s32 %s27, %s36
      %s133 = sor.u32 %s131, %s132
      %p134 = scmp.eq.s32.totalorder %s133, 0
      %s136 = sadd.s32 %s135, 1
      %s137 = scalar_select %p134, %s135, %s136
      %p140 = pneg %p134
      %p141 = scmp.eq.s32.totalorder %s18, 1
      %p142 = por %p140, %p141
      %p143 = scmp.ne.s32.totalorder %s135, %s138
      %p144 = scmp.eq.s32.totalorder %s18, 0
      %p145 = por %p143, %p144
      %p146 = scmp.ne.s32.totalorder %s135, %s138
      %p147 = scmp.eq.s32.totalorder %s23, 1
      %p148 = por %p146, %p147
      %p149 = scmp.ne.s32.totalorder %s138, %s139
      %p150 = scmp.eq.s32.totalorder %s23, 0
      %p151 = por %p149, %p150
      %p152 = scmp.ne.s32.totalorder %s138, %s139
      %p153 = scmp.eq.s32.totalorder %s24, 1
      %p154 = por %p152, %p153
      %p156 = scmp.ne.s32.totalorder %s139, %s155
      %p157 = scmp.eq.s32.totalorder %s24, 0
      %p158 = por %p156, %p157
      %p159 = scmp.le.s32.totalorder 1, %s18
      %p160 = scmp.lt.s32.totalorder %s18, 3
      %p161 = pnand %p159, %p160
      %p162 = pneg %p161
      // Predicated region
      $region9: #{tpu_custom_call.1} parent=5 // pred_check
        _
      $region10: #{tpu_custom_call.1} parent=5 // pred_check_branch
        %164 = sbr.rel (%p161) target = $region12
      $region11: #{tpu_custom_call.1} parent=5 // pred_region
        %s165 = ssub.s32 %s18, 1
      $region12: #{tpu_custom_call.1} parent=5 // pred_fallthru
        _
      %p166 = scmp.lt.s32.totalorder %s18, 2
      // Predicated region
      $region13: #{tpu_custom_call.1} parent=5 // pred_check
        %p167 = pneg %p166
      $region14: #{tpu_custom_call.1} parent=5 // pred_check_branch
        %169 = sbr.rel (%p167) target = $region16
      $region15: #{tpu_custom_call.1} parent=5 // pred_region
        // Predicated region
        $region17: #{tpu_custom_call.1} parent=15 // pred_check
          %p170 = pneg %p59
        $region18: #{tpu_custom_call.1} parent=15 // pred_check_branch
          %172 = sbr.rel (%p170) target = $region20
        $region19: #{tpu_custom_call.1} parent=15 // pred_region
          %s173 = sand.u32 %s49, 1
          %s174 = scalar_lea.sflag [#allocation3], %s173
          %s175 = sand.u32 %s49, 1
          %s176 = smul.addr %s175, 32
          %s177 = scalar_lea.vmem [#allocation2], %s176
          %s178 = smul.u32 8, %s26
          %s180 = ssub.s32 512, 512
          %181 = vsyncadd %s174, %s180
          %s182 = smul.addr %s25, 8
          %s183 = sadd.s32 %s178, %s182
          %s184 = smul.addr %s183, 64
          %s185 = scalar_lea.hbm %s0, %s184
          %s186 = sshll.u32 %s177, 4
          %s187 = int_to_ptr.vmem [resolvable:$true] %s186
          %192 = dma.hbm_to_vmem [thread:$0]  %s185, 512, %s187, %s174, 64, 64, 4
        $region20: #{tpu_custom_call.1} parent=15 // pred_fallthru
          _
        // Predicated region
        $region21: #{tpu_custom_call.1} parent=15 // pred_check
          %p193 = pneg %p87
        $region22: #{tpu_custom_call.1} parent=15 // pred_check_branch
          %195 = sbr.rel (%p193) target = $region24
        $region23: #{tpu_custom_call.1} parent=15 // pred_region
          %s196 = sand.u32 %s18, 1
          %s197 = scalar_lea.sflag [#allocation6], %s196
          %s198 = sand.u32 %s77, 1
          %s199 = smul.addr %s198, 256
          %s200 = scalar_lea.vmem [#allocation5], %s199
          %s201 = smul.u32 4, %s27
          %s203 = ssub.s32 4096, 4096
          %204 = vsyncadd %s197, %s203
          %s205 = smul.addr %s25, 64
          %s206 = sadd.s32 %s201, %s205
          %s207 = smul.addr %s206, 64
          %s208 = scalar_lea.hbm %s1, %s207
          %s209 = sshll.u32 %s200, 4
          %s210 = int_to_ptr.vmem [resolvable:$true] %s209
          %215 = dma.hbm_to_vmem [thread:$0]  %s208, 4096, %s210, %s197, 256, 256, 16
        $region24: #{tpu_custom_call.1} parent=15 // pred_fallthru
          _
        // Predicated region
        $region25: #{tpu_custom_call.1} parent=15 // pred_check
          %p216 = pneg %p115
        $region26: #{tpu_custom_call.1} parent=15 // pred_check_branch
          %218 = sbr.rel (%p216) target = $region28
        $region27: #{tpu_custom_call.1} parent=15 // pred_region
          %s219 = sand.u32 %s18, 1
          %s220 = scalar_lea.sflag [#allocation6], %s219
          %s221 = sand.u32 %s105, 1
          %s222 = smul.addr %s221, 4
          %s223 = scalar_lea.vmem [#allocation7], %s222
          %s224 = smul.u32 4, %s27
          %s226 = ssub.s32 64, 64
          %227 = vsyncadd %s220, %s226
          %s228 = smul.addr %s25, 4
          %s229 = sadd.s32 %s224, %s228
          %s230 = smul.addr %s229, 16
          %s231 = scalar_lea.hbm %s2, %s230
          %s233 = sshll.u32 %s223, 4
          %s234 = int_to_ptr.vmem [resolvable:$true] %s233
          %236 = dma.hbm_to_vmem [thread:$0]  %s231, 64, %s234, %s220
        $region28: #{tpu_custom_call.1} parent=15 // pred_fallthru
          _
      $region16: #{tpu_custom_call.1} parent=5 // pred_fallthru
        _
      %p237 = scmp.le.s32.totalorder 1, %s18
      %p238 = scmp.lt.s32.totalorder %s18, 3
      %p239 = pnand %p237, %p238
      %p240 = pneg %p239
      // Predicated region
      $region29: #{tpu_custom_call.1} parent=5 // pred_check
        _
      $region30: #{tpu_custom_call.1} parent=5 // pred_check_branch
        %242 = sbr.rel (%p239) target = $region32
      $region31: #{tpu_custom_call.1} parent=5 // pred_region
        %s243 = ssub.s32 %s18, 1
        %s244 = sand.u32 %s52, 1
        %s245 = scalar_lea.sflag [#allocation3], %s244
        %s246 = sand.u32 %s52, 1
        %s247 = smul.addr %s246, 32
        %s248 = scalar_lea.vmem [#allocation2], %s247
        // Predicated region
        $region33: #{tpu_custom_call.1} parent=31 // pred_check
          %p249 = pneg %p65
        $region34: #{tpu_custom_call.1} parent=31 // pred_check_branch
          %251 = sbr.rel (%p249) target = $region36
        $region35: #{tpu_custom_call.1} parent=31 // pred_region
          %252 = dma.done %s245, 512
        $region36: #{tpu_custom_call.1} parent=31 // pred_fallthru
          _
        %s253 = sand.u32 %s23, 1
        %s254 = scalar_lea.sflag [#allocation6], %s253
        %s255 = sand.u32 %s80, 1
        %s256 = smul.addr %s255, 256
        %s257 = scalar_lea.vmem [#allocation5], %s256
        // Predicated region
        $region37: #{tpu_custom_call.1} parent=31 // pred_check
          %p258 = pneg %p93
        $region38: #{tpu_custom_call.1} parent=31 // pred_check_branch
          %260 = sbr.rel (%p258) target = $region40
        $region39: #{tpu_custom_call.1} parent=31 // pred_region
          %261 = dma.done %s254, 4096
        $region40: #{tpu_custom_call.1} parent=31 // pred_fallthru
          _
        %s262 = sand.u32 %s23, 1
        %s263 = scalar_lea.sflag [#allocation6], %s262
        %s264 = sand.u32 %s108, 1
        %s265 = smul.addr %s264, 4
        %s266 = scalar_lea.vmem [#allocation7], %s265
        // Predicated region
        $region41: #{tpu_custom_call.1} parent=31 // pred_check
          %p267 = pneg %p121
        $region42: #{tpu_custom_call.1} parent=31 // pred_check_branch
          %269 = sbr.rel (%p267) target = $region44
        $region43: #{tpu_custom_call.1} parent=31 // pred_region
          %270 = dma.done %s263, 64
        $region44: #{tpu_custom_call.1} parent=31 // pred_fallthru
          _
        %s271 = sand.u32 %s52, 1
        %s272 = scalar_lea.sflag [#allocation3], %s271
        %s273 = sand.u32 %s52, 1
        %s274 = smul.addr %s273, 32
        %s275 = scalar_lea.vmem [#allocation2], %s274
        %p276 = pneg %p65
        %p277 = pneg %p62
        %s278 = sand.u32 %s23, 1
        %s279 = scalar_lea.sflag [#allocation6], %s278
        %s280 = sand.u32 %s80, 1
        %s281 = smul.addr %s280, 256
        %s282 = scalar_lea.vmem [#allocation5], %s281
        %p283 = pneg %p93
        %p284 = pneg %p90
        %s285 = sand.u32 %s23, 1
        %s286 = scalar_lea.sflag [#allocation6], %s285
        %s287 = sand.u32 %s108, 1
        %s288 = smul.addr %s287, 4
        %s289 = scalar_lea.vmem [#allocation7], %s288
        %p290 = pneg %p121
        %p291 = pneg %p118
        %p292 = pneg %p151
        %p293 = pneg %p148
        %s294 = sand.u32 %s138, 1
        %s295 = scalar_lea.sflag [#allocation4], %s294
        %s296 = sand.u32 %s138, 1
        %s297 = smul.addr %s296, 128
        %s298 = scalar_lea.vmem [#allocation8], %s297
        %s299 = smul.u32 8, %s29
        %s300 = smul.u32 4, %s30
        %s301 = smul.u32 4, %s30
        %s302 = smul.u32 8, %s29
        %s303 = smul.u32 4, %s30
        %v305 = vld [vmem:[%s248] sm:$0xf]
        %v306 = vld [vmem:[%s248 + $0x4] sm:$0xf]
        %v307 = vld [vmem:[%s248 + $0x8] sm:$0xf]
        %v308 = vld [vmem:[%s248 + $0xc] sm:$0xf]
        %v309 = vld [vmem:[%s248 + $0x10] sm:$0xf]
        %v310 = vld [vmem:[%s248 + $0x14] sm:$0xf]
        %v311 = vld [vmem:[%s248 + $0x18] sm:$0xf]
        %v312 = vld [vmem:[%s248 + $0x1c] sm:$0xf]
        %v313 = vld [vmem:[%s257] sm:$0xff]
        %v314 = vld [vmem:[%s257 + $0x8] sm:$0xff]
        %v315 = vld [vmem:[%s257 + $0x10] sm:$0xff]
        %v316 = vld [vmem:[%s257 + $0x18] sm:$0xff]
        %v317 = vld [vmem:[%s257 + $0x20] sm:$0xff]
        %v318 = vld [vmem:[%s257 + $0x28] sm:$0xff]
        %v319 = vld [vmem:[%s257 + $0x30] sm:$0xff]
        %v320 = vld [vmem:[%s257 + $0x38] sm:$0xff]
        %v321 = vld [vmem:[%s257 + $0x40] sm:$0xff]
        %v322 = vld [vmem:[%s257 + $0x48] sm:$0xff]
        %v323 = vld [vmem:[%s257 + $0x50] sm:$0xff]
        %v324 = vld [vmem:[%s257 + $0x58] sm:$0xff]
        %v325 = vld [vmem:[%s257 + $0x60] sm:$0xff]
        %v326 = vld [vmem:[%s257 + $0x68] sm:$0xff]
        %v327 = vld [vmem:[%s257 + $0x70] sm:$0xff]
        %v328 = vld [vmem:[%s257 + $0x78] sm:$0xff]
        %v329 = vld [vmem:[%s257 + $0x80] sm:$0xff]
        %v330 = vld [vmem:[%s257 + $0x88] sm:$0xff]
        %v331 = vld [vmem:[%s257 + $0x90] sm:$0xff]
        %v332 = vld [vmem:[%s257 + $0x98] sm:$0xff]
        %v333 = vld [vmem:[%s257 + $0xa0] sm:$0xff]
        %v334 = vld [vmem:[%s257 + $0xa8] sm:$0xff]
        %v335 = vld [vmem:[%s257 + $0xb0] sm:$0xff]
        %v336 = vld [vmem:[%s257 + $0xb8] sm:$0xff]
        %v337 = vld [vmem:[%s257 + $0xc0] sm:$0xff]
        %v338 = vld [vmem:[%s257 + $0xc8] sm:$0xff]
        %v339 = vld [vmem:[%s257 + $0xd0] sm:$0xff]
        %v340 = vld [vmem:[%s257 + $0xd8] sm:$0xff]
        %v341 = vld [vmem:[%s257 + $0xe0] sm:$0xff]
        %v342 = vld [vmem:[%s257 + $0xe8] sm:$0xff]
        %v343 = vld [vmem:[%s257 + $0xf0] sm:$0xff]
        %v344 = vld [vmem:[%s257 + $0xf8] sm:$0xff]
        %v345 = vld [vmem:[%s266] sm:$0xf]
        %v347 = vlaneseq
        %v348 = vshrl.u32 %v347, 7
        %v349 = vsub.s32 0, %v348
        %v350 = vrot.slane %v345, %v349
        %v351 = vlaneseq
        %v352 = vshrl.u32 %v351, 7
        %v353 = vsub.s32 1, %v352
        %v354 = vrot.slane %v345, %v353
        %v355 = vlaneseq
        %v356 = vshrl.u32 %v355, 7
        %v357 = vsub.s32 2, %v356
        %v358 = vrot.slane %v345, %v357
        %v359 = vlaneseq
        %v360 = vshrl.u32 %v359, 7
        %v361 = vsub.s32 3, %v360
        %v362 = vrot.slane %v345, %v361
        %v375 = vunpack.c.l.b16 %v305
        %v376 = vunpack.c.l.b16 %v306
        %v377 = vunpack.c.l.b16 %v307
        %v378 = vunpack.c.l.b16 %v308
        %v379 = vunpack.c.l.b16 %v309
        %v380 = vunpack.c.l.b16 %v310
        %v381 = vunpack.c.l.b16 %v311
        %v382 = vunpack.c.l.b16 %v312
        %v383 = vpack.c.b16 %v376, %v375
        %v384 = vpack.c.b16 %v378, %v377
        %v385 = vpack.c.b16 %v380, %v379
        %v386 = vpack.c.b16 %v382, %v381
        %v423 = vunpack.c.l.b16 %v313
        %v424 = vunpack.c.h.b16 %v313
        %v425 = vunpack.c.l.b16 %v314
        %v426 = vunpack.c.h.b16 %v314
        %v427 = vunpack.c.l.b16 %v315
        %v428 = vunpack.c.h.b16 %v315
        %v429 = vunpack.c.l.b16 %v316
        %v430 = vunpack.c.h.b16 %v316
        %v431 = vunpack.c.l.b16 %v317
        %v432 = vunpack.c.h.b16 %v317
        %v433 = vunpack.c.l.b16 %v318
        %v434 = vunpack.c.h.b16 %v318
        %v435 = vunpack.c.l.b16 %v319
        %v436 = vunpack.c.h.b16 %v319
        %v437 = vunpack.c.l.b16 %v320
        %v438 = vunpack.c.h.b16 %v320
        %v439 = vunpack.c.l.b16 %v321
        %v440 = vunpack.c.h.b16 %v321
        %v441 = vunpack.c.l.b16 %v322
        %v442 = vunpack.c.h.b16 %v322
        %v443 = vunpack.c.l.b16 %v323
        %v444 = vunpack.c.h.b16 %v323
        %v445 = vunpack.c.l.b16 %v324
        %v446 = vunpack.c.h.b16 %v324
        %v447 = vunpack.c.l.b16 %v325
        %v448 = vunpack.c.h.b16 %v325
        %v449 = vunpack.c.l.b16 %v326
        %v450 = vunpack.c.h.b16 %v326
        %v451 = vunpack.c.l.b16 %v327
        %v452 = vunpack.c.h.b16 %v327
        %v453 = vunpack.c.l.b16 %v328
        %v454 = vunpack.c.h.b16 %v328
        %v455 = vunpack.c.l.b16 %v329
        %v456 = vunpack.c.h.b16 %v329
        %v457 = vunpack.c.l.b16 %v330
        %v458 = vunpack.c.h.b16 %v330
        %v459 = vunpack.c.l.b16 %v331
        %v460 = vunpack.c.h.b16 %v331
        %v461 = vunpack.c.l.b16 %v332
        %v462 = vunpack.c.h.b16 %v332
        %v463 = vunpack.c.l.b16 %v333
        %v464 = vunpack.c.h.b16 %v333
        %v465 = vunpack.c.l.b16 %v334
        %v466 = vunpack.c.h.b16 %v334
        %v467 = vunpack.c.l.b16 %v335
        %v468 = vunpack.c.h.b16 %v335
        %v469 = vunpack.c.l.b16 %v336
        %v470 = vunpack.c.h.b16 %v336
        %v471 = vunpack.c.l.b16 %v337
        %v472 = vunpack.c.h.b16 %v337
        %v473 = vunpack.c.l.b16 %v338
        %v474 = vunpack.c.h.b16 %v338
        %v475 = vunpack.c.l.b16 %v339
        %v476 = vunpack.c.h.b16 %v339
        %v477 = vunpack.c.l.b16 %v340
        %v478 = vunpack.c.h.b16 %v340
        %v479 = vunpack.c.l.b16 %v341
        %v480 = vunpack.c.h.b16 %v341
        %v481 = vunpack.c.l.b16 %v342
        %v482 = vunpack.c.h.b16 %v342
        %v483 = vunpack.c.l.b16 %v343
        %v484 = vunpack.c.h.b16 %v343
        %v485 = vunpack.c.l.b16 %v344
        %v486 = vunpack.c.h.b16 %v344
        %v487 = vpack.c.b16 %v427, %v423
        %v488 = vpack.c.b16 %v428, %v424
        %v489 = vpack.c.b16 %v429, %v425
        %v490 = vpack.c.b16 %v430, %v426
        %v491 = vpack.c.b16 %v435, %v431
        %v492 = vpack.c.b16 %v436, %v432
        %v493 = vpack.c.b16 %v437, %v433
        %v494 = vpack.c.b16 %v438, %v434
        %v495 = vpack.c.b16 %v443, %v439
        %v496 = vpack.c.b16 %v444, %v440
        %v497 = vpack.c.b16 %v445, %v441
        %v498 = vpack.c.b16 %v446, %v442
        %v499 = vpack.c.b16 %v451, %v447
        %v500 = vpack.c.b16 %v452, %v448
        %v501 = vpack.c.b16 %v453, %v449
        %v502 = vpack.c.b16 %v454, %v450
        %v503 = vpack.c.b16 %v459, %v455
        %v504 = vpack.c.b16 %v460, %v456
        %v505 = vpack.c.b16 %v461, %v457
        %v506 = vpack.c.b16 %v462, %v458
        %v507 = vpack.c.b16 %v467, %v463
        %v508 = vpack.c.b16 %v468, %v464
        %v509 = vpack.c.b16 %v469, %v465
        %v510 = vpack.c.b16 %v470, %v466
        %v511 = vpack.c.b16 %v475, %v471
        %v512 = vpack.c.b16 %v476, %v472
        %v513 = vpack.c.b16 %v477, %v473
        %v514 = vpack.c.b16 %v478, %v474
        %v515 = vpack.c.b16 %v483, %v479
        %v516 = vpack.c.b16 %v484, %v480
        %v517 = vpack.c.b16 %v485, %v481
        %v518 = vpack.c.b16 %v486, %v482
        %551 = vmatprep.subr.bf16.mxu0 %v516
        %552 = vmatpush1.bf16.msra.mxu0 %v515
        %553 = vmatprep.subr.bf16.mxu0 %v512
        %554 = vmatpush1.bf16.msra.mxu0 %v511
        %555 = vmatprep.subr.bf16.mxu0 %v508
        %556 = vmatpush1.bf16.msra.mxu0 %v507
        %557 = vmatprep.subr.bf16.mxu0 %v504
        %558 = vmatpush1.bf16.msra.mxu0 %v503
        %559 = vmatprep.subr.bf16.mxu0 %v500
        %560 = vmatpush1.bf16.msra.mxu0 %v499
        %561 = vmatprep.subr.bf16.mxu0 %v496
        %562 = vmatpush1.bf16.msra.mxu0 %v495
        %563 = vmatprep.subr.bf16.mxu0 %v492
        %564 = vmatpush1.bf16.msra.mxu0 %v491
        %565 = vmatprep.subr.bf16.mxu0 %v488
        %566 = vmatpush1.bf16.msra.mxu0 %v487
        %567 = vmatprep.subr.bf16.mxu0 0
        %568 = vmatpush2.bf16.msra.mxu0 0
        %569 = vmatprep.subr.bf16.mxu0 0
        %570 = vmatpush2.bf16.msra.mxu0 0
        %571 = vmatprep.subr.bf16.mxu0 0
        %572 = vmatpush2.bf16.msra.mxu0 0
        %573 = vmatprep.subr.bf16.mxu0 0
        %574 = vmatpush2.bf16.msra.mxu0 0
        %575 = vmatprep.subr.bf16.mxu0 0
        %576 = vmatpush2.bf16.msra.mxu0 0
        %577 = vmatprep.subr.bf16.mxu0 0
        %578 = vmatpush2.bf16.msra.mxu0 0
        %579 = vmatprep.subr.bf16.mxu0 0
        %580 = vmatpush2.bf16.msra.mxu0 0
        %581 = vmatprep.subr.bf16.mxu0 0
        %582 = vmatpush2.bf16.msra.mxu0 0
        %583 = vmatprep.mubr.bf16.mxu0 0
        %584 = vmatmul.mubr.bf16.gmra.mxu0 %v383
        %v585 = vpop.f32.mrf.mxu0
        %v586 = vadd.f32 %v350, %v585
        %v587 = vpop.f32.mrf.mxu0
        %v588 = vadd.f32 %v354, %v587
        %v589 = vpop.f32.mrf.mxu0
        %v590 = vadd.f32 %v350, %v589
        %v591 = vpop.f32.mrf.mxu0
        %v592 = vadd.f32 %v354, %v591
        %593 = vmatprep.mubr.bf16.mxu0 0
        %594 = vmatmul.mubr.bf16.gmra.mxu0 %v384
        %v595 = vpop.f32.mrf.mxu0
        %v596 = vadd.f32 %v350, %v595
        %v597 = vpop.f32.mrf.mxu0
        %v598 = vadd.f32 %v354, %v597
        %v599 = vpop.f32.mrf.mxu0
        %v600 = vadd.f32 %v350, %v599
        %v601 = vpop.f32.mrf.mxu0
        %v602 = vadd.f32 %v354, %v601
        %603 = vmatprep.mubr.bf16.mxu0 0
        %604 = vmatmul.mubr.bf16.gmra.mxu0 %v385
        %v605 = vpop.f32.mrf.mxu0
        %v606 = vadd.f32 %v350, %v605
        %v607 = vpop.f32.mrf.mxu0
        %v608 = vadd.f32 %v354, %v607
        %v609 = vpop.f32.mrf.mxu0
        %v610 = vadd.f32 %v350, %v609
        %v611 = vpop.f32.mrf.mxu0
        %v612 = vadd.f32 %v354, %v611
        %613 = vmatprep.mubr.bf16.mxu0 0
        %614 = vmatmul.mubr.bf16.gmra.mxu0 %v386
        %v615 = vpop.f32.mrf.mxu0
        %v616 = vadd.f32 %v350, %v615
        %v617 = vpop.f32.mrf.mxu0
        %v618 = vadd.f32 %v354, %v617
        %v619 = vpop.f32.mrf.mxu0
        %v620 = vadd.f32 %v350, %v619
        %v621 = vpop.f32.mrf.mxu0
        %v622 = vadd.f32 %v354, %v621
        %623 = vdwg.mxu0
        %624 = vmatprep.subr.bf16.mxu0 %v518
        %625 = vmatpush1.bf16.msra.mxu0 %v517
        %626 = vmatprep.subr.bf16.mxu0 %v514
        %627 = vmatpush1.bf16.msra.mxu0 %v513
        %628 = vmatprep.subr.bf16.mxu0 %v510
        %629 = vmatpush1.bf16.msra.mxu0 %v509
        %630 = vmatprep.subr.bf16.mxu0 %v506
        %631 = vmatpush1.bf16.msra.mxu0 %v505
        %632 = vmatprep.subr.bf16.mxu0 %v502
        %633 = vmatpush1.bf16.msra.mxu0 %v501
        %634 = vmatprep.subr.bf16.mxu0 %v498
        %635 = vmatpush1.bf16.msra.mxu0 %v497
        %636 = vmatprep.subr.bf16.mxu0 %v494
        %637 = vmatpush1.bf16.msra.mxu0 %v493
        %638 = vmatprep.subr.bf16.mxu0 %v490
        %639 = vmatpush1.bf16.msra.mxu0 %v489
        %640 = vmatprep.subr.bf16.mxu0 0
        %641 = vmatpush2.bf16.msra.mxu0 0
        %642 = vmatprep.subr.bf16.mxu0 0
        %643 = vmatpush2.bf16.msra.mxu0 0
        %644 = vmatprep.subr.bf16.mxu0 0
        %645 = vmatpush2.bf16.msra.mxu0 0
        %646 = vmatprep.subr.bf16.mxu0 0
        %647 = vmatpush2.bf16.msra.mxu0 0
        %648 = vmatprep.subr.bf16.mxu0 0
        %649 = vmatpush2.bf16.msra.mxu0 0
        %650 = vmatprep.subr.bf16.mxu0 0
        %651 = vmatpush2.bf16.msra.mxu0 0
        %652 = vmatprep.subr.bf16.mxu0 0
        %653 = vmatpush2.bf16.msra.mxu0 0
        %654 = vmatprep.subr.bf16.mxu0 0
        %655 = vmatpush2.bf16.msra.mxu0 0
        %656 = vmatprep.mubr.bf16.mxu0 0
        %657 = vmatmul.mubr.bf16.gmra.mxu0 %v383
        %v658 = vpop.f32.mrf.mxu0
        %v659 = vadd.f32 %v358, %v658
        %v660 = vpop.f32.mrf.mxu0
        %v661 = vadd.f32 %v362, %v660
        %v662 = vpop.f32.mrf.mxu0
        %v663 = vadd.f32 %v358, %v662
        %v664 = vpop.f32.mrf.mxu0
        %v665 = vadd.f32 %v362, %v664
        %666 = vmatprep.mubr.bf16.mxu0 0
        %667 = vmatmul.mubr.bf16.gmra.mxu0 %v384
        %v668 = vpop.f32.mrf.mxu0
        %v669 = vadd.f32 %v358, %v668
        %v670 = vpop.f32.mrf.mxu0
        %v671 = vadd.f32 %v362, %v670
        %v672 = vpop.f32.mrf.mxu0
        %v673 = vadd.f32 %v358, %v672
        %v674 = vpop.f32.mrf.mxu0
        %v675 = vadd.f32 %v362, %v674
        %676 = vmatprep.mubr.bf16.mxu0 0
        %677 = vmatmul.mubr.bf16.gmra.mxu0 %v385
        %v678 = vpop.f32.mrf.mxu0
        %v679 = vadd.f32 %v358, %v678
        %v680 = vpop.f32.mrf.mxu0
        %v681 = vadd.f32 %v362, %v680
        %v682 = vpop.f32.mrf.mxu0
        %v683 = vadd.f32 %v358, %v682
        %v684 = vpop.f32.mrf.mxu0
        %v685 = vadd.f32 %v362, %v684
        %686 = vmatprep.mubr.bf16.mxu0 0
        %687 = vmatmul.mubr.bf16.gmra.mxu0 %v386
        %v688 = vpop.f32.mrf.mxu0
        %v689 = vadd.f32 %v358, %v688
        %v690 = vpop.f32.mrf.mxu0
        %v691 = vadd.f32 %v362, %v690
        %v692 = vpop.f32.mrf.mxu0
        %v693 = vadd.f32 %v358, %v692
        %v694 = vpop.f32.mrf.mxu0
        %v695 = vadd.f32 %v362, %v694
        %696 = vdwg.mxu0
        %v697 = vpack.c.bf16 %v590, %v586
        %v698 = vpack.c.bf16 %v592, %v588
        %v699 = vpack.c.bf16 %v663, %v659
        %v700 = vpack.c.bf16 %v665, %v661
        %v701 = vpack.c.bf16 %v600, %v596
        %v702 = vpack.c.bf16 %v602, %v598
        %v703 = vpack.c.bf16 %v673, %v669
        %v704 = vpack.c.bf16 %v675, %v671
        %v705 = vpack.c.bf16 %v610, %v606
        %v706 = vpack.c.bf16 %v612, %v608
        %v707 = vpack.c.bf16 %v683, %v679
        %v708 = vpack.c.bf16 %v685, %v681
        %v709 = vpack.c.bf16 %v620, %v616
        %v710 = vpack.c.bf16 %v622, %v618
        %v711 = vpack.c.bf16 %v693, %v689
        %v712 = vpack.c.bf16 %v695, %v691
        %v729 = vunpack.c.l.b16 %v697
        %v730 = vunpack.c.l.b16 %v698
        %v731 = vunpack.c.l.b16 %v699
        %v732 = vunpack.c.l.b16 %v700
        %v733 = vunpack.c.h.b16 %v697
        %v734 = vunpack.c.h.b16 %v698
        %v735 = vunpack.c.h.b16 %v699
        %v736 = vunpack.c.h.b16 %v700
        %v737 = vunpack.c.l.b16 %v701
        %v738 = vunpack.c.l.b16 %v702
        %v739 = vunpack.c.l.b16 %v703
        %v740 = vunpack.c.l.b16 %v704
        %v741 = vunpack.c.h.b16 %v701
        %v742 = vunpack.c.h.b16 %v702
        %v743 = vunpack.c.h.b16 %v703
        %v744 = vunpack.c.h.b16 %v704
        %v745 = vunpack.c.l.b16 %v705
        %v746 = vunpack.c.l.b16 %v706
        %v747 = vunpack.c.l.b16 %v707
        %v748 = vunpack.c.l.b16 %v708
        %v749 = vunpack.c.h.b16 %v705
        %v750 = vunpack.c.h.b16 %v706
        %v751 = vunpack.c.h.b16 %v707
        %v752 = vunpack.c.h.b16 %v708
        %v753 = vunpack.c.l.b16 %v709
        %v754 = vunpack.c.l.b16 %v710
        %v755 = vunpack.c.l.b16 %v711
        %v756 = vunpack.c.l.b16 %v712
        %v757 = vunpack.c.h.b16 %v709
        %v758 = vunpack.c.h.b16 %v710
        %v759 = vunpack.c.h.b16 %v711
        %v760 = vunpack.c.h.b16 %v712
        %v761 = vpack.c.b16 %v730, %v729
        %v762 = vpack.c.b16 %v732, %v731
        %v763 = vpack.c.b16 %v734, %v733
        %v764 = vpack.c.b16 %v736, %v735
        %v765 = vpack.c.b16 %v738, %v737
        %v766 = vpack.c.b16 %v740, %v739
        %v767 = vpack.c.b16 %v742, %v741
        %v768 = vpack.c.b16 %v744, %v743
        %v769 = vpack.c.b16 %v746, %v745
        %v770 = vpack.c.b16 %v748, %v747
        %v771 = vpack.c.b16 %v750, %v749
        %v772 = vpack.c.b16 %v752, %v751
        %v773 = vpack.c.b16 %v754, %v753
        %v774 = vpack.c.b16 %v756, %v755
        %v775 = vpack.c.b16 %v758, %v757
        %v776 = vpack.c.b16 %v760, %v759
        %793 = vst [vmem:[%s298] sm:$0xff] %v761
        %794 = vst [vmem:[%s298 + $0x8] sm:$0xff] %v762
        %795 = vst [vmem:[%s298 + $0x10] sm:$0xff] %v763
        %796 = vst [vmem:[%s298 + $0x18] sm:$0xff] %v764
        %797 = vst [vmem:[%s298 + $0x20] sm:$0xff] %v765
        %798 = vst [vmem:[%s298 + $0x28] sm:$0xff] %v766
        %799 = vst [vmem:[%s298 + $0x30] sm:$0xff] %v767
        %800 = vst [vmem:[%s298 + $0x38] sm:$0xff] %v768
        %801 = vst [vmem:[%s298 + $0x40] sm:$0xff] %v769
        %802 = vst [vmem:[%s298 + $0x48] sm:$0xff] %v770
        %803 = vst [vmem:[%s298 + $0x50] sm:$0xff] %v771
        %804 = vst [vmem:[%s298 + $0x58] sm:$0xff] %v772
        %805 = vst [vmem:[%s298 + $0x60] sm:$0xff] %v773
        %806 = vst [vmem:[%s298 + $0x68] sm:$0xff] %v774
        %807 = vst [vmem:[%s298 + $0x70] sm:$0xff] %v775
        %808 = vst [vmem:[%s298 + $0x78] sm:$0xff] %v776
        %s809 = sand.u32 %s138, 1
        %s810 = scalar_lea.sflag [#allocation4], %s809
        %s811 = sand.u32 %s138, 1
        %s812 = smul.addr %s811, 128
        %s813 = scalar_lea.vmem [#allocation8], %s812
        // Predicated region
        $region45: #{tpu_custom_call.1} parent=31 // pred_check
          %p814 = pneg %p148
        $region46: #{tpu_custom_call.1} parent=31 // pred_check_branch
          %816 = sbr.rel (%p814) target = $region48
        $region47: #{tpu_custom_call.1} parent=31 // pred_region
          %s817 = smul.u32 8, %s29
          %s818 = smul.u32 4, %s30
          %s820 = ssub.s32 2048, 2048
          %821 = vsyncadd %s810, %s820
          %s822 = smul.addr %s817, 4
          %s823 = sadd.s32 %s818, %s822
          %s824 = smul.addr %s28, 32
          %s825 = sadd.s32 %s823, %s824
          %s826 = smul.addr %s825, 64
          %s827 = scalar_lea.hbm %s3, %s826
          %s828 = sshll.u32 %s813, 4
          %s829 = int_to_ptr.vmem [resolvable:$true] %s828
          %834 = dma.vmem_to_hbm [thread:$0]  %s829, 2048, %s827, %s810, 256, 256, 16
        $region48: #{tpu_custom_call.1} parent=31 // pred_fallthru
          _
      $region32: #{tpu_custom_call.1} parent=5 // pred_fallthru
        _
      %p835 = scmp.le.s32.totalorder 2, %s18
      // Predicated region
      $region49: #{tpu_custom_call.1} parent=5 // pred_check
        %p836 = pneg %p835
      $region50: #{tpu_custom_call.1} parent=5 // pred_check_branch
        %838 = sbr.rel (%p836) target = $region52
      $region51: #{tpu_custom_call.1} parent=5 // pred_region
        %s839 = ssub.s32 %s18, 2
        // Predicated region
        $region53: #{tpu_custom_call.1} parent=51 // pred_check
          %p840 = pneg %p154
        $region54: #{tpu_custom_call.1} parent=51 // pred_check_branch
          %842 = sbr.rel (%p840) target = $region56
        $region55: #{tpu_custom_call.1} parent=51 // pred_region
          %s843 = sand.u32 %s139, 1
          %s844 = scalar_lea.sflag [#allocation4], %s843
          %s845 = sand.u32 %s139, 1
          %s846 = smul.addr %s845, 128
          %s847 = scalar_lea.vmem [#allocation8], %s846
          %848 = dma.done %s844, 2048
        $region56: #{tpu_custom_call.1} parent=51 // pred_fallthru
          _
      $region52: #{tpu_custom_call.1} parent=5 // pred_fallthru
        _
    $region6: #{tpu_custom_call.1} parent=1 // loop_footer
      %s22 = sadd.s32 1, %s18
    $region7: #{tpu_custom_call.1} parent=1 // loop_footer_branch
      %17 = sbr.rel target = $region3
    $region8: #{tpu_custom_call.1} parent=1 // loop_exit
      _
    %849 = vsyncpa [#allocation3], 1
    %s850 = scalar_lea.sflag [#allocation3], 1
    %851 = vsyncpa %s850, 1
    %852 = vsyncpa [#allocation6], 1
    %s853 = scalar_lea.sflag [#allocation6], 1
    %854 = vsyncpa %s853, 1
    %855 = vsyncpa [#allocation4], 1
    %s856 = scalar_lea.sflag [#allocation4], 1
    %857 = vsyncpa %s856, 1

</llo_original>
